<compile_context>
chip_gen: v7x
topology: tpu7x:2x2x1
jax: 0.10.0
libtpu: 0.0.40
codegen_flags: <defaults>
</compile_context>

<pallas_src>
import jax
import jax.numpy as jnp
from jax import lax
from jax.experimental import pallas as pl
from jax.experimental.pallas import tpu as pltpu


def _round_up(n, m):
    return ((n + m - 1) // m) * m


def _choose_tile_128(n, target):
    """Largest multiple of 128 <= target that divides n (n must be a multiple of 128)."""
    t = max(128, min(n, (target // 128) * 128))
    while n % t:
        t -= 128
    return t


# --------------------------- Kernel 1: fused QKV projection ---------------------------

def _qkv_proj_kernel(x_ref, w_ref, b_ref, q_ref, k_ref, v_ref):
    """x_ref (TM, F) bf16, w_ref (F, 3*Hp) bf16, b_ref (1, 3*Hp) f32."""
    Hp = q_ref.shape[-1]
    qkv = jnp.dot(x_ref[...], w_ref[...],
                  preferred_element_type=jnp.float32) + b_ref[...]
    # Lane-aligned (multiple-of-128) column slices of the fused result.
    q_ref[...] = qkv[:, :Hp].astype(q_ref.dtype)
    k_ref[...] = qkv[:, Hp:2 * Hp].astype(k_ref.dtype)
    v_ref[...] = qkv[:, 2 * Hp:].astype(v_ref.dtype)


def _qkv_projection(x2d, w_qkv, b_qkv, *, tm, vmem_limit):
    M, F = x2d.shape
    Hp = w_qkv.shape[1] // 3
    TM = _choose_tile_128(M, tm)

    grid_spec = pltpu.PrefetchScalarGridSpec(
        num_scalar_prefetch=0,
        grid=(M // TM,),
        in_specs=[
            pl.BlockSpec((TM, F), lambda i: (i, 0)),
            # Constant index_map -> weights stay resident in VMEM across the grid.
            # TODO(synk): for very large F (>=4K), block the projection over an
            # F-reduction grid axis instead of holding all of W resident (v7x has
            # only 64 MiB VMEM), and single-buffer the constant specs.
            pl.BlockSpec((F, 3 * Hp), lambda i: (0, 0)),
            pl.BlockSpec((1, 3 * Hp), lambda i: (0, 0)),
        ],
        out_specs=(
            pl.BlockSpec((TM, Hp), lambda i: (i, 0)),
            pl.BlockSpec((TM, Hp), lambda i: (i, 0)),
            pl.BlockSpec((TM, Hp), lambda i: (i, 0)),
        ),
    )
    shp = jax.ShapeDtypeStruct((M, Hp), jnp.bfloat16)
    return pl.pallas_call(
        _qkv_proj_kernel,
        out_shape=(shp, shp, shp),
        grid_spec=grid_spec,
        compiler_params=pltpu.CompilerParams(
            dimension_semantics=("parallel",),
            vmem_limit_bytes=vmem_limit,
        ),
    )(x2d, w_qkv, b_qkv)


# --------------------------- Kernel 2: flash attention ---------------------------

def _make_flash_kernel(TQ, TK, s_valid, need_mask):
    def kernel(q_ref, k_ref, v_ref, o_ref, m_scr, l_scr, acc_scr):
        ki = pl.program_id(2)

        @pl.when(ki == 0)
        def _init():
            m_scr[...] = jnp.full_like(m_scr, -jnp.inf)
            l_scr[...] = jnp.zeros_like(l_scr)
            acc_scr[...] = jnp.zeros_like(acc_scr)

        # scores = q @ k^T as an 'nt' contraction (bf16 operands -> MXU, f32 out).
        s = lax.dot_general(q_ref[...], k_ref[...],
                            dimension_numbers=(((1,), (1,)), ((), ())),
                            preferred_element_type=jnp.float32)      # (TQ, TK)

        if need_mask:
            # Mask keys beyond the true sequence length (S was padded to 128).
            col = ki * TK + lax.broadcasted_iota(jnp.int32, (TQ, TK), 1)
            s = jnp.where(col < s_valid, s, jnp.float32(-1e30))

        # Online softmax update (reference module has no 1/sqrt(d) scaling).
        m_prev = m_scr[...]
        m_new = jnp.maximum(m_prev, jnp.max(s, axis=-1, keepdims=True))
        alpha = jnp.exp(m_prev - m_new)
        # TODO(synk): if the inner loop turns EUP-bound on v6e/v7x, evaluate the
        # exp in bf16 there (EUP bf16 path); kept f32 for v5e parity/numerics.
        p = jnp.exp(s - m_new)
        l_scr[...] = alpha * l_scr[...] + jnp.sum(p, axis=-1, keepdims=True)
        acc_scr[...] = alpha * acc_scr[...] + jnp.dot(
            p.astype(v_ref.dtype), v_ref[...],
            preferred_element_type=jnp.float32)
        m_scr[...] = m_new

        @pl.when(ki == pl.num_programs(2) - 1)
        def _finalize():
            inv_l = pl.reciprocal(l_scr[...], approx=False)   # once per q-tile
            o_ref[...] = (acc_scr[...] * inv_l).astype(o_ref.dtype)

    return kernel


def _flash_attention(q, k, v, out_dtype, *, s_valid, tq, tk, vmem_limit):
    B, Sp, Hp = q.shape
    TQ = _choose_tile_128(Sp, tq)
    TK = _choose_tile_128(Sp, tk)
    need_mask = s_valid != Sp
    kernel = _make_flash_kernel(TQ, TK, s_valid, need_mask)

    grid_spec = pltpu.PrefetchScalarGridSpec(
        num_scalar_prefetch=0,
        grid=(B, Sp // TQ, Sp // TK),
        in_specs=[
            pl.BlockSpec((None, TQ, Hp), lambda b, qi, ki: (b, qi, 0)),
            pl.BlockSpec((None, TK, Hp), lambda b, qi, ki: (b, ki, 0)),
            pl.BlockSpec((None, TK, Hp), lambda b, qi, ki: (b, ki, 0)),
        ],
        out_specs=pl.BlockSpec((None, TQ, Hp), lambda b, qi, ki: (b, qi, 0)),
        scratch_shapes=[
            pltpu.VMEM((TQ, 1), jnp.float32),    # running max
            pltpu.VMEM((TQ, 1), jnp.float32),    # running sum
            pltpu.VMEM((TQ, Hp), jnp.float32),   # output accumulator
        ],
    )
    return pl.pallas_call(
        kernel,
        out_shape=jax.ShapeDtypeStruct((B, Sp, Hp), out_dtype),
        grid_spec=grid_spec,
        compiler_params=pltpu.CompilerParams(
            dimension_semantics=("parallel", "parallel", "arbitrary"),
            vmem_limit_bytes=vmem_limit,
        ),
    )(q, k, v)


# --------------------------- Wrappers ---------------------------

def make_fused_qkv_params(wq, bq, wk, bk, wv, bv):
    """Build lane-padded, bf16 fused QKV params ONCE (hoisted out of the hot path).

    w*: [F, H] (pre-transposed nn.Linear weights so y = x @ W + b), b*: [1, H].
    """
    H = wq.shape[1]
    Hp = _round_up(H, 128)

    def pad_cols(a):
        a = a.reshape(1, -1) if a.ndim == 1 else a
        return jnp.pad(a, ((0, 0), (0, Hp - a.shape[-1])))

    w_qkv = jnp.concatenate([pad_cols(wq), pad_cols(wk), pad_cols(wv)],
                            axis=1).astype(jnp.bfloat16)
    # Bias stays f32: it never enters the MXU (added post-accumulation on the VPU).
    b_qkv = jnp.concatenate([pad_cols(bq), pad_cols(bk), pad_cols(bv)],
                            axis=1).astype(jnp.float32)
    return w_qkv, b_qkv, H


def word_attention_fused(x, w_qkv, b_qkv, H, *, tq=256, tk=512, tm=512,
                         vmem_limit_bytes=64 * 1024 * 1024):
    """x: [B, S, F]; fused bf16 W [F, 3*Hp], f32 b [1, 3*Hp]  ->  [B, S, H]."""
    B, S, F = x.shape
    Hp = w_qkv.shape[1] // 3

    # Pad S to a multiple of 128; padded keys are masked in the attention kernel.
    Sp = _round_up(S, 128)
    xp = x if Sp == S else jnp.pad(x, ((0, 0), (0, Sp - S), (0, 0)))
    x2d = xp.astype(jnp.bfloat16).reshape(B * Sp, F)

    # 1) Fused QKV projection — each row of x projected exactly once.
    q2, k2, v2 = _qkv_projection(x2d, w_qkv, b_qkv, tm=tm,
                                 vmem_limit=vmem_limit_bytes)
    q = q2.reshape(B, Sp, Hp)
    k = k2.reshape(B, Sp, Hp)
    v = v2.reshape(B, Sp, Hp)

    # 2) Flash attention (online softmax, masked padded keys).
    out = _flash_attention(q, k, v, x.dtype, s_valid=S, tq=tq, tk=tk,
                           vmem_limit=vmem_limit_bytes)

    if Sp != S or Hp != H:
        # TODO(synk): for a fully fused pipeline, keep the padded [B, Sp, Hp]
        # layout downstream instead of paying this slice pass.
        out = out[:, :S, :H]
    return out


def word_attention(x, wq, bq, wk, bk, wv, bv, **kw):
    w_qkv, b_qkv, H = make_fused_qkv_params(wq, bq, wk, bk, wv, bv)
    return word_attention_fused(x, w_qkv, b_qkv, H, **kw)


def reference_word_attention(x, wq, bq, wk, bk, wv, bv):
    q = x @ wq + bq
    k = x @ wk + bk
    v = x @ wv + bv
    scores = jnp.einsum("bsh,bth->bst", q, k)
    scores = jax.nn.softmax(scores, axis=-1)
    return jnp.einsum("bst,bth->bsh", scores, v)


if __name__ == "__main__":
    # Small shapes consistent with the module: batch=2, seq=8,
    # in_features=32, hidden_size=32.
    B, S, F, H = 2, 8, 32, 32

    key = jax.random.PRNGKey(0)
    kx, kq, kbq, kk, kbk, kv_key, kbv = jax.random.split(key, 7)

    # Deterministic init mirroring nn.Linear's uniform(-1/sqrt(F), 1/sqrt(F)).
    bound = 1.0 / (F ** 0.5)
    x = jax.random.normal(kx, (B, S, F), dtype=jnp.float32)
    wq = jax.random.uniform(kq, (F, H), jnp.float32, -bound, bound)
    bq = jax.random.uniform(kbq, (1, H), jnp.float32, -bound, bound)
    wk = jax.random.uniform(kk, (F, H), jnp.float32, -bound, bound)
    bk = jax.random.uniform(kbk, (1, H), jnp.float32, -bound, bound)
    wv = jax.random.uniform(kv_key, (F, H), jnp.float32, -bound, bound)
    bv = jax.random.uniform(kbv, (1, H), jnp.float32, -bound, bound)

    # Fused params built once (hoisted out of the per-call path).
    w_qkv, b_qkv, Hh = make_fused_qkv_params(wq, bq, wk, bk, wv, bv)

    out = word_attention_fused(x, w_qkv, b_qkv, Hh)
    out = jax.block_until_ready(out)

    ref = reference_word_attention(x, wq, bq, wk, bk, wv, bv)
    assert out.shape == (B, S, H)
    # bf16 operands with f32 accumulation: tolerance loosened accordingly.
    assert jnp.allclose(out, ref, atol=2e-2, rtol=2e-2), "mismatch vs reference"

    print("KERNEL_OK")
</pallas_src>

<mosaic_0001>
module attributes {stable_mosaic.version = 11 : i64} {
  func.func @_qkv_proj_kernel(%arg0: i32, %arg1: memref<256x32xbf16, #tpu.memory_space<vmem>>, %arg2: memref<32x384xbf16, #tpu.memory_space<vmem>>, %arg3: memref<1x384xf32, #tpu.memory_space<vmem>>, %arg4: memref<256x128xbf16, #tpu.memory_space<vmem>>, %arg5: memref<256x128xbf16, #tpu.memory_space<vmem>>, %arg6: memref<256x128xbf16, #tpu.memory_space<vmem>>) attributes {dimension_semantics = [#tpu.dimension_semantics<parallel>], iteration_bounds = array<i64: 1>, scalar_prefetch = 0 : i64, scratch_operands = 0 : i64, tpu.core_type = #tpu.core_type<tc>, window_params = [{transform_indices = @transform_0, window_bounds = array<i64: 256, 32>}, {pipeline_mode = #tpu.pipeline_mode<synchronous>, transform_indices = @transform_1, window_bounds = array<i64: 32, 384>}, {pipeline_mode = #tpu.pipeline_mode<synchronous>, transform_indices = @transform_2, window_bounds = array<i64: 1, 384>}, {transform_indices = @transform_3, window_bounds = array<i64: 256, 128>}, {transform_indices = @transform_4, window_bounds = array<i64: 256, 128>}, {transform_indices = @transform_5, window_bounds = array<i64: 256, 128>}]} {
    %c0 = arith.constant 0 : index
    %c0_0 = arith.constant 0 : index
    %0 = vector.load %arg1[%c0, %c0_0] : memref<256x32xbf16, #tpu.memory_space<vmem>>, vector<256x32xbf16>
    %c0_1 = arith.constant 0 : index
    %c0_2 = arith.constant 0 : index
    %1 = vector.load %arg2[%c0_1, %c0_2] : memref<32x384xbf16, #tpu.memory_space<vmem>>, vector<32x384xbf16>
    %cst = arith.constant dense<0.000000e+00> : vector<256x384xf32>
    %2 = tpu.matmul %0, %1, %cst {dimension_numbers = #tpu.dot_dimension_numbers<[1], [0], [0], [1], [0, 0, 1, 1], [], []>} : vector<256x32xbf16>, vector<32x384xbf16>, vector<256x384xf32> -> vector<256x384xf32>
    %c0_3 = arith.constant 0 : index
    %c0_4 = arith.constant 0 : index
    %3 = vector.load %arg3[%c0_3, %c0_4] : memref<1x384xf32, #tpu.memory_space<vmem>>, vector<1x384xf32>
    %4 = vector.broadcast %3 : vector<1x384xf32> to vector<256x384xf32>
    %5 = arith.addf %2, %4 : vector<256x384xf32>
    %6 = vector.extract_strided_slice %5 {offsets = [0, 0], sizes = [256, 128], strides = [1, 1]} : vector<256x384xf32> to vector<256x128xf32>
    %7 = arith.truncf %6 : vector<256x128xf32> to vector<256x128xbf16>
    %c0_5 = arith.constant 0 : index
    %c0_6 = arith.constant 0 : index
    %8 = vector.load %arg4[%c0_5, %c0_6] : memref<256x128xbf16, #tpu.memory_space<vmem>>, vector<256x128xbf16>
    tpu.vector_store %arg4[%c0_5, %c0_6], %7 {strides = array<i32>} : memref<256x128xbf16, #tpu.memory_space<vmem>>, vector<256x128xbf16>,
    %9 = vector.extract_strided_slice %5 {offsets = [0, 128], sizes = [256, 128], strides = [1, 1]} : vector<256x384xf32> to vector<256x128xf32>
    %10 = arith.truncf %9 : vector<256x128xf32> to vector<256x128xbf16>
    %c0_7 = arith.constant 0 : index
    %c0_8 = arith.constant 0 : index
    %11 = vector.load %arg5[%c0_7, %c0_8] : memref<256x128xbf16, #tpu.memory_space<vmem>>, vector<256x128xbf16>
    tpu.vector_store %arg5[%c0_7, %c0_8], %10 {strides = array<i32>} : memref<256x128xbf16, #tpu.memory_space<vmem>>, vector<256x128xbf16>,
    %12 = vector.extract_strided_slice %5 {offsets = [0, 256], sizes = [256, 128], strides = [1, 1]} : vector<256x384xf32> to vector<256x128xf32>
    %13 = arith.truncf %12 : vector<256x128xf32> to vector<256x128xbf16>
    %c0_9 = arith.constant 0 : index
    %c0_10 = arith.constant 0 : index
    %14 = vector.load %arg6[%c0_9, %c0_10] : memref<256x128xbf16, #tpu.memory_space<vmem>>, vector<256x128xbf16>
    tpu.vector_store %arg6[%c0_9, %c0_10], %13 {strides = array<i32>} : memref<256x128xbf16, #tpu.memory_space<vmem>>, vector<256x128xbf16>,
    return
  }
  func.func @transform_0(%arg0: i32) -> (i32, i32) {
    %c0_i32 = arith.constant 0 : i32
    %c0_i32_0 = arith.constant 0 : i32
    return %arg0, %c0_i32 : i32, i32
  }
  func.func @transform_1(%arg0: i32) -> (i32, i32) {
    %c0_i32 = arith.constant 0 : i32
    %c0_i32_0 = arith.constant 0 : i32
    %c0_i32_1 = arith.constant 0 : i32
    return %c0_i32, %c0_i32_0 : i32, i32
  }
  func.func @transform_2(%arg0: i32) -> (i32, i32) {
    %c0_i32 = arith.constant 0 : i32
    %c0_i32_0 = arith.constant 0 : i32
    %c0_i32_1 = arith.constant 0 : i32
    return %c0_i32, %c0_i32_0 : i32, i32
  }
  func.func @transform_3(%arg0: i32) -> (i32, i32) {
    %c0_i32 = arith.constant 0 : i32
    %c0_i32_0 = arith.constant 0 : i32
    return %arg0, %c0_i32 : i32, i32
  }
  func.func @transform_4(%arg0: i32) -> (i32, i32) {
    %c0_i32 = arith.constant 0 : i32
    %c0_i32_0 = arith.constant 0 : i32
    return %arg0, %c0_i32 : i32, i32
  }
  func.func @transform_5(%arg0: i32) -> (i32, i32) {
    %c0_i32 = arith.constant 0 : i32
    %c0_i32_0 = arith.constant 0 : i32
    return %arg0, %c0_i32 : i32, i32
  }
}

</mosaic_0001>

<llo_original>
// kernel: tpu_custom_call.1
$region0: #{tpu_custom_call.1}
  #allocation0 [shape = 'u32[]', space=smem, size = 0x4, offset = 0x4, fixed_abs, tag = 'smem constant byte address 0x4 - core index']
  #allocation1 [shape = 'u32[144,128]{1,0:T(1,128)}', space=vmem, size = 0x12000, scoped, tag = 'internal scratch']
  %s0 = inlined_call_operand.hbm [shape: bf16[256,32], index: 0, kind: input, shape index: {}]
  %s1 = inlined_call_operand.hbm [shape: bf16[32,384], index: 1, kind: input, shape index: {}]
  %s2 = inlined_call_operand.hbm [shape: f32[1,384], index: 2, kind: input, shape index: {}]
  %s3 = inlined_call_operand.hbm [shape: bf16[256,128], index: 3, kind: output, shape index: {0}]
  %s4 = inlined_call_operand.hbm [shape: bf16[256,128], index: 4, kind: output, shape index: {1}]
  %s5 = inlined_call_operand.hbm [shape: bf16[256,128], index: 5, kind: output, shape index: {2}]
  %6 = xla_tuple %s3, %s4, %s5
  %s7 = sld [smem:[#allocation0]]
  $region50: #{tpu_custom_call.1} parent=0
    _
  %s9 = ssub.s32 1, %s7
  %s10 = scalar_select 0, %s9, %s7
  $region1: #{tpu_custom_call.1} parent=0
    #allocation2 [shape = 'u8[65536]{0}', space=vmem, size = 0x10000, scoped, tag = 'input window, operand 0, single buffered']
    #allocation3 [shape = 's32[1]{0}', space=sflag, size = 0x4, scoped, tag = 'scoped memory for tpu_custom_call.1']
    #allocation4 [shape = 's32[1]{0}', space=sflag, size = 0x4, scoped, tag = 'scoped memory for tpu_custom_call.1']
    #allocation5 [shape = 'u8[24576]{0}', space=vmem, size = 0x6000, scoped, tag = 'input window, operand 1, single buffered']
    #allocation6 [shape = 's32[1]{0}', space=sflag, size = 0x4, scoped, tag = 'scoped memory for tpu_custom_call.1']
    #allocation7 [shape = 'u8[1536]{0}', space=vmem, size = 0x800, scoped, tag = 'input window, operand 2, single buffered']
    #allocation8 [shape = 'u8[65536]{0}', space=vmem, size = 0x10000, scoped, tag = 'output window, operand 0, single buffered']
    #allocation9 [shape = 'u8[65536]{0}', space=vmem, size = 0x10000, scoped, tag = 'output window, operand 1, single buffered']
    #allocation10 [shape = 's32[1]{0}', space=sflag, size = 0x4, scoped, tag = 'scoped memory for tpu_custom_call.1']
    #allocation11 [shape = 'u8[65536]{0}', space=vmem, size = 0x10000, scoped, tag = 'output window, operand 2, single buffered']
    %11 = vsyncpa [#allocation3], 0
    %12 = vsyncpa [#allocation6], 0
    %13 = vsyncpa [#allocation4], 0
    %14 = vsyncpa [#allocation10], 0
    // Predicated region
    $region2: #{tpu_custom_call.1} parent=1 // pred_check
      _
    $region3: #{tpu_custom_call.1} parent=1 // pred_check_branch
      %16 = sbr.rel (0) target = $region5
    $region4: #{tpu_custom_call.1} parent=1 // pred_region
      %s18 = ssub.s32 2048, 2048
      %19 = vsyncadd [#allocation3], %s18
      %s20 = sshll.u32 [#allocation2], 4
      %s21 = int_to_ptr.vmem [resolvable:$true] %s20
      %26 = dma.hbm_to_vmem [thread:$0]  %s0, 2048, %s21, [#allocation3], 64, 64, 4
    $region5: #{tpu_custom_call.1} parent=1 // pred_fallthru
      _
    // Predicated region
    $region6: #{tpu_custom_call.1} parent=1 // pred_check
      _
    $region7: #{tpu_custom_call.1} parent=1 // pred_check_branch
      %28 = sbr.rel (0) target = $region9
    $region8: #{tpu_custom_call.1} parent=1 // pred_region
      %s30 = ssub.s32 768, 768
      %31 = vsyncadd [#allocation6], %s30
      %s32 = sshll.u32 [#allocation5], 4
      %s33 = int_to_ptr.vmem [resolvable:$true] %s32
      %38 = dma.hbm_to_vmem [thread:$0]  %s1, 768, %s33, [#allocation6], 192, 192, 12
    $region9: #{tpu_custom_call.1} parent=1 // pred_fallthru
      _
    // Predicated region
    $region10: #{tpu_custom_call.1} parent=1 // pred_check
      _
    $region11: #{tpu_custom_call.1} parent=1 // pred_check_branch
      %40 = sbr.rel (0) target = $region13
    $region12: #{tpu_custom_call.1} parent=1 // pred_region
      %s42 = ssub.s32 48, 48
      %43 = vsyncadd [#allocation6], %s42
      %s45 = sshll.u32 [#allocation7], 4
      %s46 = int_to_ptr.vmem [resolvable:$true] %s45
      %48 = dma.hbm_to_vmem [thread:$0]  %s2, 48, %s46, [#allocation6]
    $region13: #{tpu_custom_call.1} parent=1 // pred_fallthru
      _
    // Predicated region
    $region14: #{tpu_custom_call.1} parent=1 // pred_check
      _
    $region15: #{tpu_custom_call.1} parent=1 // pred_check_branch
      %50 = sbr.rel (0) target = $region17
    $region16: #{tpu_custom_call.1} parent=1 // pred_region
      %51 = dma.done [#allocation3], 2048
    $region17: #{tpu_custom_call.1} parent=1 // pred_fallthru
      _
    // Predicated region
    $region18: #{tpu_custom_call.1} parent=1 // pred_check
      _
    $region19: #{tpu_custom_call.1} parent=1 // pred_check_branch
      %53 = sbr.rel (0) target = $region21
    $region20: #{tpu_custom_call.1} parent=1 // pred_region
      %54 = dma.done [#allocation6], 768
    $region21: #{tpu_custom_call.1} parent=1 // pred_fallthru
      _
    // Predicated region
    $region22: #{tpu_custom_call.1} parent=1 // pred_check
      _
    $region23: #{tpu_custom_call.1} parent=1 // pred_check_branch
      %56 = sbr.rel (0) target = $region25
    $region24: #{tpu_custom_call.1} parent=1 // pred_region
      %57 = dma.done [#allocation6], 48
    $region25: #{tpu_custom_call.1} parent=1 // pred_fallthru
      _
    %v59 = vld [vmem:[#allocation2] sm:$0xf]
    %v60 = vld [vmem:[#allocation2 + $0x4] sm:$0xf]
    %v61 = vld [vmem:[#allocation2 + $0x8] sm:$0xf]
    %v62 = vld [vmem:[#allocation2 + $0xc] sm:$0xf]
    %v63 = vld [vmem:[#allocation2 + $0x10] sm:$0xf]
    %v64 = vld [vmem:[#allocation2 + $0x14] sm:$0xf]
    %v65 = vld [vmem:[#allocation2 + $0x18] sm:$0xf]
    %v66 = vld [vmem:[#allocation2 + $0x1c] sm:$0xf]
    %v67 = vld [vmem:[#allocation2 + $0x20] sm:$0xf]
    %v68 = vld [vmem:[#allocation2 + $0x24] sm:$0xf]
    %v69 = vld [vmem:[#allocation2 + $0x28] sm:$0xf]
    %v70 = vld [vmem:[#allocation2 + $0x2c] sm:$0xf]
    %v71 = vld [vmem:[#allocation2 + $0x30] sm:$0xf]
    %v72 = vld [vmem:[#allocation2 + $0x34] sm:$0xf]
    %v73 = vld [vmem:[#allocation2 + $0x38] sm:$0xf]
    %v74 = vld [vmem:[#allocation2 + $0x3c] sm:$0xf]
    %v75 = vld [vmem:[#allocation2 + $0x40] sm:$0xf]
    %v76 = vld [vmem:[#allocation2 + $0x44] sm:$0xf]
    %v77 = vld [vmem:[#allocation2 + $0x48] sm:$0xf]
    %v78 = vld [vmem:[#allocation2 + $0x4c] sm:$0xf]
    %v79 = vld [vmem:[#allocation2 + $0x50] sm:$0xf]
    %v80 = vld [vmem:[#allocation2 + $0x54] sm:$0xf]
    %v81 = vld [vmem:[#allocation2 + $0x58] sm:$0xf]
    %v82 = vld [vmem:[#allocation2 + $0x5c] sm:$0xf]
    %v83 = vld [vmem:[#allocation2 + $0x60] sm:$0xf]
    %v84 = vld [vmem:[#allocation2 + $0x64] sm:$0xf]
    %v85 = vld [vmem:[#allocation2 + $0x68] sm:$0xf]
    %v86 = vld [vmem:[#allocation2 + $0x6c] sm:$0xf]
    %v87 = vld [vmem:[#allocation2 + $0x70] sm:$0xf]
    %v88 = vld [vmem:[#allocation2 + $0x74] sm:$0xf]
    %v89 = vld [vmem:[#allocation2 + $0x78] sm:$0xf]
    %v90 = vld [vmem:[#allocation2 + $0x7c] sm:$0xf]
    %v91 = vld [vmem:[#allocation5] sm:$0xff]
    %v92 = vld [vmem:[#allocation5 + $0x8] sm:$0xf]
    %v93 = vld [vmem:[#allocation5 + $0xc] sm:$0xff]
    %v94 = vld [vmem:[#allocation5 + $0x14] sm:$0xf]
    %v95 = vld [vmem:[#allocation5 + $0x18] sm:$0xff]
    %v96 = vld [vmem:[#allocation5 + $0x20] sm:$0xf]
    %v97 = vld [vmem:[#allocation5 + $0x24] sm:$0xff]
    %v98 = vld [vmem:[#allocation5 + $0x2c] sm:$0xf]
    %v99 = vld [vmem:[#allocation7] sm:$0x7]
    %v101 = vlaneseq
    %v102 = vshrl.u32 %v101, 7
    %v103 = vsub.s32 0, %v102
    %v104 = vrot.slane %v99, %v103
    %v105 = vlaneseq
    %v106 = vshrl.u32 %v105, 7
    %v107 = vsub.s32 1, %v106
    %v108 = vrot.slane %v99, %v107
    %v109 = vlaneseq
    %v110 = vshrl.u32 %v109, 7
    %v111 = vsub.s32 2, %v110
    %v112 = vrot.slane %v99, %v111
    %v148 = vunpack.c.l.b16 %v59
    %v149 = vunpack.c.l.b16 %v60
    %v150 = vunpack.c.l.b16 %v61
    %v151 = vunpack.c.l.b16 %v62
    %v152 = vunpack.c.l.b16 %v63
    %v153 = vunpack.c.l.b16 %v64
    %v154 = vunpack.c.l.b16 %v65
    %v155 = vunpack.c.l.b16 %v66
    %v156 = vunpack.c.l.b16 %v67
    %v157 = vunpack.c.l.b16 %v68
    %v158 = vunpack.c.l.b16 %v69
    %v159 = vunpack.c.l.b16 %v70
    %v160 = vunpack.c.l.b16 %v71
    %v161 = vunpack.c.l.b16 %v72
    %v162 = vunpack.c.l.b16 %v73
    %v163 = vunpack.c.l.b16 %v74
    %v164 = vunpack.c.l.b16 %v75
    %v165 = vunpack.c.l.b16 %v76
    %v166 = vunpack.c.l.b16 %v77
    %v167 = vunpack.c.l.b16 %v78
    %v168 = vunpack.c.l.b16 %v79
    %v169 = vunpack.c.l.b16 %v80
    %v170 = vunpack.c.l.b16 %v81
    %v171 = vunpack.c.l.b16 %v82
    %v172 = vunpack.c.l.b16 %v83
    %v173 = vunpack.c.l.b16 %v84
    %v174 = vunpack.c.l.b16 %v85
    %v175 = vunpack.c.l.b16 %v86
    %v176 = vunpack.c.l.b16 %v87
    %v177 = vunpack.c.l.b16 %v88
    %v178 = vunpack.c.l.b16 %v89
    %v179 = vunpack.c.l.b16 %v90
    %v180 = vpack.c.b16 %v149, %v148
    %v181 = vpack.c.b16 %v151, %v150
    %v182 = vpack.c.b16 %v153, %v152
    %v183 = vpack.c.b16 %v155, %v154
    %v184 = vpack.c.b16 %v157, %v156
    %v185 = vpack.c.b16 %v159, %v158
    %v186 = vpack.c.b16 %v161, %v160
    %v187 = vpack.c.b16 %v163, %v162
    %v188 = vpack.c.b16 %v165, %v164
    %v189 = vpack.c.b16 %v167, %v166
    %v190 = vpack.c.b16 %v169, %v168
    %v191 = vpack.c.b16 %v171, %v170
    %v192 = vpack.c.b16 %v173, %v172
    %v193 = vpack.c.b16 %v175, %v174
    %v194 = vpack.c.b16 %v177, %v176
    %v195 = vpack.c.b16 %v179, %v178
    %v204 = vunpack.c.l.b16 %v91
    %v205 = vunpack.c.h.b16 %v91
    %v206 = vunpack.c.l.b16 %v92
    %v207 = vunpack.c.l.b16 %v93
    %v208 = vunpack.c.h.b16 %v93
    %v209 = vunpack.c.l.b16 %v94
    %v210 = vunpack.c.l.b16 %v95
    %v211 = vunpack.c.h.b16 %v95
    %v212 = vunpack.c.l.b16 %v96
    %v213 = vunpack.c.l.b16 %v97
    %v214 = vunpack.c.h.b16 %v97
    %v215 = vunpack.c.l.b16 %v98
    %v216 = vpack.c.b16 %v207, %v204
    %v217 = vpack.c.b16 %v208, %v205
    %v218 = vpack.c.b16 %v209, %v206
    %v219 = vpack.c.b16 %v213, %v210
    %v220 = vpack.c.b16 %v214, %v211
    %v221 = vpack.c.b16 %v215, %v212
    %vm228 = vcmask 261120
    %v230 = vsel %vm228, %v180, 0
    %v233 = vsel %vm228, %v181, 0
    %v236 = vsel %vm228, %v182, 0
    %v239 = vsel %vm228, %v183, 0
    %v242 = vsel %vm228, %v184, 0
    %v245 = vsel %vm228, %v185, 0
    %v248 = vsel %vm228, %v186, 0
    %v251 = vsel %vm228, %v187, 0
    %v254 = vsel %vm228, %v188, 0
    %v257 = vsel %vm228, %v189, 0
    %v260 = vsel %vm228, %v190, 0
    %v263 = vsel %vm228, %v191, 0
    %v266 = vsel %vm228, %v192, 0
    %v269 = vsel %vm228, %v193, 0
    %v272 = vsel %vm228, %v194, 0
    %v275 = vsel %vm228, %v195, 0
    %277 = vmatprep.subr.bf16.mxu0 %v217
    %278 = vmatpush1.bf16.msra.mxu0 %v216
    %279 = vmatprep.subr.bf16.mxu0 %v220
    %280 = vmatpush1.bf16.msra.mxu0 %v219
    %281 = vmatprep.subr.bf16.mxu0 0
    %282 = vmatpush1.bf16.msra.mxu0 0
    %283 = vmatprep.subr.bf16.mxu0 0
    %284 = vmatpush1.bf16.msra.mxu0 0
    %285 = vmatprep.subr.bf16.mxu0 0
    %286 = vmatpush1.bf16.msra.mxu0 0
    %287 = vmatprep.subr.bf16.mxu0 0
    %288 = vmatpush1.bf16.msra.mxu0 0
    %289 = vmatprep.subr.bf16.mxu0 0
    %290 = vmatpush1.bf16.msra.mxu0 0
    %291 = vmatprep.subr.bf16.mxu0 0
    %292 = vmatpush1.bf16.msra.mxu0 0
    %293 = vmatprep.subr.bf16.mxu0 0
    %294 = vmatpush1.bf16.msra.mxu0 0
    %295 = vmatprep.subr.bf16.mxu0 0
    %296 = vmatpush1.bf16.msra.mxu0 0
    %297 = vmatprep.subr.bf16.mxu0 0
    %298 = vmatpush1.bf16.msra.mxu0 0
    %299 = vmatprep.subr.bf16.mxu0 0
    %300 = vmatpush1.bf16.msra.mxu0 0
    %301 = vmatprep.subr.bf16.mxu0 0
    %302 = vmatpush1.bf16.msra.mxu0 0
    %303 = vmatprep.subr.bf16.mxu0 0
    %304 = vmatpush1.bf16.msra.mxu0 0
    %305 = vmatprep.subr.bf16.mxu0 0
    %306 = vmatpush1.bf16.msra.mxu0 0
    %307 = vmatprep.subr.bf16.mxu0 0
    %308 = vmatpush1.bf16.msra.mxu0 0
    %309 = vmatprep.mubr.bf16.mxu0 0
    %310 = vmatmul.mubr.bf16.gmra.mrb[0].mxu0 %v230
    %v311 = vpop.f32.mrb[0].mxu0
    %v312 = vadd.f32 %v104, %v311
    %v313 = vpop.f32.mrb[0].mxu0
    %v314 = vadd.f32 %v108, %v313
    %v315 = vpop.f32.mrb[0].mxu0
    %v316 = vadd.f32 %v104, %v315
    %v317 = vpop.f32.mrb[0].mxu0
    %v318 = vadd.f32 %v108, %v317
    %319 = vmatprep.mubr.bf16.mxu0 0
    %320 = vmatmul.mubr.bf16.gmra.mrb[0].mxu0 %v233
    %v321 = vpop.f32.mrb[0].mxu0
    %v322 = vadd.f32 %v104, %v321
    %v323 = vpop.f32.mrb[0].mxu0
    %v324 = vadd.f32 %v108, %v323
    %v325 = vpop.f32.mrb[0].mxu0
    %v326 = vadd.f32 %v104, %v325
    %v327 = vpop.f32.mrb[0].mxu0
    %v328 = vadd.f32 %v108, %v327
    %329 = vmatprep.mubr.bf16.mxu0 0
    %330 = vmatmul.mubr.bf16.gmra.mrb[0].mxu0 %v236
    %v331 = vpop.f32.mrb[0].mxu0
    %v332 = vadd.f32 %v104, %v331
    %v333 = vpop.f32.mrb[0].mxu0
    %v334 = vadd.f32 %v108, %v333
    %v335 = vpop.f32.mrb[0].mxu0
    %v336 = vadd.f32 %v104, %v335
    %v337 = vpop.f32.mrb[0].mxu0
    %v338 = vadd.f32 %v108, %v337
    %339 = vmatprep.mubr.bf16.mxu0 0
    %340 = vmatmul.mubr.bf16.gmra.mrb[0].mxu0 %v239
    %v341 = vpop.f32.mrb[0].mxu0
    %v342 = vadd.f32 %v104, %v341
    %v343 = vpop.f32.mrb[0].mxu0
    %v344 = vadd.f32 %v108, %v343
    %v345 = vpop.f32.mrb[0].mxu0
    %v346 = vadd.f32 %v104, %v345
    %v347 = vpop.f32.mrb[0].mxu0
    %v348 = vadd.f32 %v108, %v347
    %349 = vmatprep.mubr.bf16.mxu0 0
    %350 = vmatmul.mubr.bf16.gmra.mrb[0].mxu0 %v242
    %v351 = vpop.f32.mrb[0].mxu0
    %v352 = vadd.f32 %v104, %v351
    %v353 = vpop.f32.mrb[0].mxu0
    %v354 = vadd.f32 %v108, %v353
    %v355 = vpop.f32.mrb[0].mxu0
    %v356 = vadd.f32 %v104, %v355
    %v357 = vpop.f32.mrb[0].mxu0
    %v358 = vadd.f32 %v108, %v357
    %359 = vmatprep.mubr.bf16.mxu0 0
    %360 = vmatmul.mubr.bf16.gmra.mrb[0].mxu0 %v245
    %v361 = vpop.f32.mrb[0].mxu0
    %v362 = vadd.f32 %v104, %v361
    %v363 = vpop.f32.mrb[0].mxu0
    %v364 = vadd.f32 %v108, %v363
    %v365 = vpop.f32.mrb[0].mxu0
    %v366 = vadd.f32 %v104, %v365
    %v367 = vpop.f32.mrb[0].mxu0
    %v368 = vadd.f32 %v108, %v367
    %369 = vmatprep.mubr.bf16.mxu0 0
    %370 = vmatmul.mubr.bf16.gmra.mrb[0].mxu0 %v248
    %v371 = vpop.f32.mrb[0].mxu0
    %v372 = vadd.f32 %v104, %v371
    %v373 = vpop.f32.mrb[0].mxu0
    %v374 = vadd.f32 %v108, %v373
    %v375 = vpop.f32.mrb[0].mxu0
    %v376 = vadd.f32 %v104, %v375
    %v377 = vpop.f32.mrb[0].mxu0
    %v378 = vadd.f32 %v108, %v377
    %379 = vmatprep.mubr.bf16.mxu0 0
    %380 = vmatmul.mubr.bf16.gmra.mrb[0].mxu0 %v251
    %v381 = vpop.f32.mrb[0].mxu0
    %v382 = vadd.f32 %v104, %v381
    %v383 = vpop.f32.mrb[0].mxu0
    %v384 = vadd.f32 %v108, %v383
    %v385 = vpop.f32.mrb[0].mxu0
    %v386 = vadd.f32 %v104, %v385
    %v387 = vpop.f32.mrb[0].mxu0
    %v388 = vadd.f32 %v108, %v387
    %389 = vmatprep.mubr.bf16.mxu0 0
    %390 = vmatmul.mubr.bf16.gmra.mrb[0].mxu0 %v254
    %v391 = vpop.f32.mrb[0].mxu0
    %v392 = vadd.f32 %v104, %v391
    %v393 = vpop.f32.mrb[0].mxu0
    %v394 = vadd.f32 %v108, %v393
    %v395 = vpop.f32.mrb[0].mxu0
    %v396 = vadd.f32 %v104, %v395
    %v397 = vpop.f32.mrb[0].mxu0
    %v398 = vadd.f32 %v108, %v397
    %399 = vmatprep.mubr.bf16.mxu0 0
    %400 = vmatmul.mubr.bf16.gmra.mrb[0].mxu0 %v257
    %v401 = vpop.f32.mrb[0].mxu0
    %v402 = vadd.f32 %v104, %v401
    %v403 = vpop.f32.mrb[0].mxu0
    %v404 = vadd.f32 %v108, %v403
    %v405 = vpop.f32.mrb[0].mxu0
    %v406 = vadd.f32 %v104, %v405
    %v407 = vpop.f32.mrb[0].mxu0
    %v408 = vadd.f32 %v108, %v407
    %409 = vmatprep.mubr.bf16.mxu0 0
    %410 = vmatmul.mubr.bf16.gmra.mrb[0].mxu0 %v260
    %v411 = vpop.f32.mrb[0].mxu0
    %v412 = vadd.f32 %v104, %v411
    %v413 = vpop.f32.mrb[0].mxu0
    %v414 = vadd.f32 %v108, %v413
    %v415 = vpop.f32.mrb[0].mxu0
    %v416 = vadd.f32 %v104, %v415
    %v417 = vpop.f32.mrb[0].mxu0
    %v418 = vadd.f32 %v108, %v417
    %419 = vmatprep.mubr.bf16.mxu0 0
    %420 = vmatmul.mubr.bf16.gmra.mrb[0].mxu0 %v263
    %v421 = vpop.f32.mrb[0].mxu0
    %v422 = vadd.f32 %v104, %v421
    %v423 = vpop.f32.mrb[0].mxu0
    %v424 = vadd.f32 %v108, %v423
    %v425 = vpop.f32.mrb[0].mxu0
    %v426 = vadd.f32 %v104, %v425
    %v427 = vpop.f32.mrb[0].mxu0
    %v428 = vadd.f32 %v108, %v427
    %429 = vmatprep.mubr.bf16.mxu0 0
    %430 = vmatmul.mubr.bf16.gmra.mrb[0].mxu0 %v266
    %v431 = vpop.f32.mrb[0].mxu0
    %v432 = vadd.f32 %v104, %v431
    %v433 = vpop.f32.mrb[0].mxu0
    %v434 = vadd.f32 %v108, %v433
    %v435 = vpop.f32.mrb[0].mxu0
    %v436 = vadd.f32 %v104, %v435
    %v437 = vpop.f32.mrb[0].mxu0
    %v438 = vadd.f32 %v108, %v437
    %439 = vmatprep.mubr.bf16.mxu0 0
    %440 = vmatmul.mubr.bf16.gmra.mrb[0].mxu0 %v269
    %v441 = vpop.f32.mrb[0].mxu0
    %v442 = vadd.f32 %v104, %v441
    %v443 = vpop.f32.mrb[0].mxu0
    %v444 = vadd.f32 %v108, %v443
    %v445 = vpop.f32.mrb[0].mxu0
    %v446 = vadd.f32 %v104, %v445
    %v447 = vpop.f32.mrb[0].mxu0
    %v448 = vadd.f32 %v108, %v447
    %449 = vmatprep.mubr.bf16.mxu0 0
    %450 = vmatmul.mubr.bf16.gmra.mrb[0].mxu0 %v272
    %v451 = vpop.f32.mrb[0].mxu0
    %v452 = vadd.f32 %v104, %v451
    %v453 = vpop.f32.mrb[0].mxu0
    %v454 = vadd.f32 %v108, %v453
    %v455 = vpop.f32.mrb[0].mxu0
    %v456 = vadd.f32 %v104, %v455
    %v457 = vpop.f32.mrb[0].mxu0
    %v458 = vadd.f32 %v108, %v457
    %459 = vmatprep.mubr.bf16.mxu0 0
    %460 = vmatmul.mubr.bf16.gmra.mrb[0].mxu0 %v275
    %v461 = vpop.f32.mrb[0].mxu0
    %v462 = vadd.f32 %v104, %v461
    %v463 = vpop.f32.mrb[0].mxu0
    %v464 = vadd.f32 %v108, %v463
    %v465 = vpop.f32.mrb[0].mxu0
    %v466 = vadd.f32 %v104, %v465
    %v467 = vpop.f32.mrb[0].mxu0
    %v468 = vadd.f32 %v108, %v467
    %469 = vdwg.mxu0
    %470 = vmatprep.subr.bf16.mxu0 0
    %471 = vmatpush1.bf16.msra.mxu0 %v218
    %472 = vmatprep.subr.bf16.mxu0 0
    %473 = vmatpush1.bf16.msra.mxu0 %v221
    %474 = vmatprep.subr.bf16.mxu0 0
    %475 = vmatpush1.bf16.msra.mxu0 0
    %476 = vmatprep.subr.bf16.mxu0 0
    %477 = vmatpush1.bf16.msra.mxu0 0
    %478 = vmatprep.subr.bf16.mxu0 0
    %479 = vmatpush1.bf16.msra.mxu0 0
    %480 = vmatprep.subr.bf16.mxu0 0
    %481 = vmatpush1.bf16.msra.mxu0 0
    %482 = vmatprep.subr.bf16.mxu0 0
    %483 = vmatpush1.bf16.msra.mxu0 0
    %484 = vmatprep.subr.bf16.mxu0 0
    %485 = vmatpush1.bf16.msra.mxu0 0
    %486 = vmatprep.subr.bf16.mxu0 0
    %487 = vmatpush1.bf16.msra.mxu0 0
    %488 = vmatprep.subr.bf16.mxu0 0
    %489 = vmatpush1.bf16.msra.mxu0 0
    %490 = vmatprep.subr.bf16.mxu0 0
    %491 = vmatpush1.bf16.msra.mxu0 0
    %492 = vmatprep.subr.bf16.mxu0 0
    %493 = vmatpush1.bf16.msra.mxu0 0
    %494 = vmatprep.subr.bf16.mxu0 0
    %495 = vmatpush1.bf16.msra.mxu0 0
    %496 = vmatprep.subr.bf16.mxu0 0
    %497 = vmatpush1.bf16.msra.mxu0 0
    %498 = vmatprep.subr.bf16.mxu0 0
    %499 = vmatpush1.bf16.msra.mxu0 0
    %500 = vmatprep.subr.bf16.mxu0 0
    %501 = vmatpush1.bf16.msra.mxu0 0
    %502 = vmatprep.mubr.bf16.mxu0 0
    %503 = vmatmul.mubr.bf16.gmra.mrb[0].mxu0 %v230
    %v504 = vpop.f32.mrb[0].mxu0
    %v505 = vadd.f32 %v112, %v504
    %v506 = vpop.f32.mrb[0].mxu0
    %v507 = vpop.f32.mrb[0].mxu0
    %v508 = vadd.f32 %v112, %v507
    %v509 = vpop.f32.mrb[0].mxu0
    %510 = vmatprep.mubr.bf16.mxu0 0
    %511 = vmatmul.mubr.bf16.gmra.mrb[0].mxu0 %v233
    %v512 = vpop.f32.mrb[0].mxu0
    %v513 = vadd.f32 %v112, %v512
    %v514 = vpop.f32.mrb[0].mxu0
    %v515 = vpop.f32.mrb[0].mxu0
    %v516 = vadd.f32 %v112, %v515
    %v517 = vpop.f32.mrb[0].mxu0
    %518 = vmatprep.mubr.bf16.mxu0 0
    %519 = vmatmul.mubr.bf16.gmra.mrb[0].mxu0 %v236
    %v520 = vpop.f32.mrb[0].mxu0
    %v521 = vadd.f32 %v112, %v520
    %v522 = vpop.f32.mrb[0].mxu0
    %v523 = vpop.f32.mrb[0].mxu0
    %v524 = vadd.f32 %v112, %v523
    %v525 = vpop.f32.mrb[0].mxu0
    %526 = vmatprep.mubr.bf16.mxu0 0
    %527 = vmatmul.mubr.bf16.gmra.mrb[0].mxu0 %v239
    %v528 = vpop.f32.mrb[0].mxu0
    %v529 = vadd.f32 %v112, %v528
    %v530 = vpop.f32.mrb[0].mxu0
    %v531 = vpop.f32.mrb[0].mxu0
    %v532 = vadd.f32 %v112, %v531
    %v533 = vpop.f32.mrb[0].mxu0
    %534 = vmatprep.mubr.bf16.mxu0 0
    %535 = vmatmul.mubr.bf16.gmra.mrb[0].mxu0 %v242
    %v536 = vpop.f32.mrb[0].mxu0
    %v537 = vadd.f32 %v112, %v536
    %v538 = vpop.f32.mrb[0].mxu0
    %v539 = vpop.f32.mrb[0].mxu0
    %v540 = vadd.f32 %v112, %v539
    %v541 = vpop.f32.mrb[0].mxu0
    %542 = vmatprep.mubr.bf16.mxu0 0
    %543 = vmatmul.mubr.bf16.gmra.mrb[0].mxu0 %v245
    %v544 = vpop.f32.mrb[0].mxu0
    %v545 = vadd.f32 %v112, %v544
    %v546 = vpop.f32.mrb[0].mxu0
    %v547 = vpop.f32.mrb[0].mxu0
    %v548 = vadd.f32 %v112, %v547
    %v549 = vpop.f32.mrb[0].mxu0
    %550 = vmatprep.mubr.bf16.mxu0 0
    %551 = vmatmul.mubr.bf16.gmra.mrb[0].mxu0 %v248
    %v552 = vpop.f32.mrb[0].mxu0
    %v553 = vadd.f32 %v112, %v552
    %v554 = vpop.f32.mrb[0].mxu0
    %v555 = vpop.f32.mrb[0].mxu0
    %v556 = vadd.f32 %v112, %v555
    %v557 = vpop.f32.mrb[0].mxu0
    %558 = vmatprep.mubr.bf16.mxu0 0
    %559 = vmatmul.mubr.bf16.gmra.mrb[0].mxu0 %v251
    %v560 = vpop.f32.mrb[0].mxu0
    %v561 = vadd.f32 %v112, %v560
    %v562 = vpop.f32.mrb[0].mxu0
    %v563 = vpop.f32.mrb[0].mxu0
    %v564 = vadd.f32 %v112, %v563
    %v565 = vpop.f32.mrb[0].mxu0
    %566 = vmatprep.mubr.bf16.mxu0 0
    %567 = vmatmul.mubr.bf16.gmra.mrb[0].mxu0 %v254
    %v568 = vpop.f32.mrb[0].mxu0
    %v569 = vadd.f32 %v112, %v568
    %v570 = vpop.f32.mrb[0].mxu0
    %v571 = vpop.f32.mrb[0].mxu0
    %v572 = vadd.f32 %v112, %v571
    %v573 = vpop.f32.mrb[0].mxu0
    %574 = vmatprep.mubr.bf16.mxu0 0
    %575 = vmatmul.mubr.bf16.gmra.mrb[0].mxu0 %v257
    %v576 = vpop.f32.mrb[0].mxu0
    %v577 = vadd.f32 %v112, %v576
    %v578 = vpop.f32.mrb[0].mxu0
    %v579 = vpop.f32.mrb[0].mxu0
    %v580 = vadd.f32 %v112, %v579
    %v581 = vpop.f32.mrb[0].mxu0
    %582 = vmatprep.mubr.bf16.mxu0 0
    %583 = vmatmul.mubr.bf16.gmra.mrb[0].mxu0 %v260
    %v584 = vpop.f32.mrb[0].mxu0
    %v585 = vadd.f32 %v112, %v584
    %v586 = vpop.f32.mrb[0].mxu0
    %v587 = vpop.f32.mrb[0].mxu0
    %v588 = vadd.f32 %v112, %v587
    %v589 = vpop.f32.mrb[0].mxu0
    %590 = vmatprep.mubr.bf16.mxu0 0
    %591 = vmatmul.mubr.bf16.gmra.mrb[0].mxu0 %v263
    %v592 = vpop.f32.mrb[0].mxu0
    %v593 = vadd.f32 %v112, %v592
    %v594 = vpop.f32.mrb[0].mxu0
    %v595 = vpop.f32.mrb[0].mxu0
    %v596 = vadd.f32 %v112, %v595
    %v597 = vpop.f32.mrb[0].mxu0
    %598 = vmatprep.mubr.bf16.mxu0 0
    %599 = vmatmul.mubr.bf16.gmra.mrb[0].mxu0 %v266
    %v600 = vpop.f32.mrb[0].mxu0
    %v601 = vadd.f32 %v112, %v600
    %v602 = vpop.f32.mrb[0].mxu0
    %v603 = vpop.f32.mrb[0].mxu0
    %v604 = vadd.f32 %v112, %v603
    %v605 = vpop.f32.mrb[0].mxu0
    %606 = vmatprep.mubr.bf16.mxu0 0
    %607 = vmatmul.mubr.bf16.gmra.mrb[0].mxu0 %v269
    %v608 = vpop.f32.mrb[0].mxu0
    %v609 = vadd.f32 %v112, %v608
    %v610 = vpop.f32.mrb[0].mxu0
    %v611 = vpop.f32.mrb[0].mxu0
    %v612 = vadd.f32 %v112, %v611
    %v613 = vpop.f32.mrb[0].mxu0
    %614 = vmatprep.mubr.bf16.mxu0 0
    %615 = vmatmul.mubr.bf16.gmra.mrb[0].mxu0 %v272
    %v616 = vpop.f32.mrb[0].mxu0
    %v617 = vadd.f32 %v112, %v616
    %v618 = vpop.f32.mrb[0].mxu0
    %v619 = vpop.f32.mrb[0].mxu0
    %v620 = vadd.f32 %v112, %v619
    %v621 = vpop.f32.mrb[0].mxu0
    %622 = vmatprep.mubr.bf16.mxu0 0
    %623 = vmatmul.mubr.bf16.gmra.mrb[0].mxu0 %v275
    %v624 = vpop.f32.mrb[0].mxu0
    %v625 = vadd.f32 %v112, %v624
    %v626 = vpop.f32.mrb[0].mxu0
    %v627 = vpop.f32.mrb[0].mxu0
    %v628 = vadd.f32 %v112, %v627
    %v629 = vpop.f32.mrb[0].mxu0
    %630 = vdwg.mxu0
    %v631 = vpack.c.bf16 %v316, %v312
    %v632 = vpack.c.bf16 %v326, %v322
    %v633 = vpack.c.bf16 %v336, %v332
    %v634 = vpack.c.bf16 %v346, %v342
    %v635 = vpack.c.bf16 %v356, %v352
    %v636 = vpack.c.bf16 %v366, %v362
    %v637 = vpack.c.bf16 %v376, %v372
    %v638 = vpack.c.bf16 %v386, %v382
    %v639 = vpack.c.bf16 %v396, %v392
    %v640 = vpack.c.bf16 %v406, %v402
    %v641 = vpack.c.bf16 %v416, %v412
    %v642 = vpack.c.bf16 %v426, %v422
    %v643 = vpack.c.bf16 %v436, %v432
    %v644 = vpack.c.bf16 %v446, %v442
    %v645 = vpack.c.bf16 %v456, %v452
    %v646 = vpack.c.bf16 %v466, %v462
    %v663 = vunpack.c.l.b16 %v631
    %v664 = vunpack.c.h.b16 %v631
    %v665 = vunpack.c.l.b16 %v632
    %v666 = vunpack.c.h.b16 %v632
    %v667 = vunpack.c.l.b16 %v633
    %v668 = vunpack.c.h.b16 %v633
    %v669 = vunpack.c.l.b16 %v634
    %v670 = vunpack.c.h.b16 %v634
    %v671 = vunpack.c.l.b16 %v635
    %v672 = vunpack.c.h.b16 %v635
    %v673 = vunpack.c.l.b16 %v636
    %v674 = vunpack.c.h.b16 %v636
    %v675 = vunpack.c.l.b16 %v637
    %v676 = vunpack.c.h.b16 %v637
    %v677 = vunpack.c.l.b16 %v638
    %v678 = vunpack.c.h.b16 %v638
    %v679 = vunpack.c.l.b16 %v639
    %v680 = vunpack.c.h.b16 %v639
    %v681 = vunpack.c.l.b16 %v640
    %v682 = vunpack.c.h.b16 %v640
    %v683 = vunpack.c.l.b16 %v641
    %v684 = vunpack.c.h.b16 %v641
    %v685 = vunpack.c.l.b16 %v642
    %v686 = vunpack.c.h.b16 %v642
    %v687 = vunpack.c.l.b16 %v643
    %v688 = vunpack.c.h.b16 %v643
    %v689 = vunpack.c.l.b16 %v644
    %v690 = vunpack.c.h.b16 %v644
    %v691 = vunpack.c.l.b16 %v645
    %v692 = vunpack.c.h.b16 %v645
    %v693 = vunpack.c.l.b16 %v646
    %v694 = vunpack.c.h.b16 %v646
    %v695 = vpack.c.b16 %v663, %v663
    %v696 = vpack.c.b16 %v664, %v664
    %v697 = vpack.c.b16 %v665, %v665
    %v698 = vpack.c.b16 %v666, %v666
    %v699 = vpack.c.b16 %v667, %v667
    %v700 = vpack.c.b16 %v668, %v668
    %v701 = vpack.c.b16 %v669, %v669
    %v702 = vpack.c.b16 %v670, %v670
    %v703 = vpack.c.b16 %v671, %v671
    %v704 = vpack.c.b16 %v672, %v672
    %v705 = vpack.c.b16 %v673, %v673
    %v706 = vpack.c.b16 %v674, %v674
    %v707 = vpack.c.b16 %v675, %v675
    %v708 = vpack.c.b16 %v676, %v676
    %v709 = vpack.c.b16 %v677, %v677
    %v710 = vpack.c.b16 %v678, %v678
    %v711 = vpack.c.b16 %v679, %v679
    %v712 = vpack.c.b16 %v680, %v680
    %v713 = vpack.c.b16 %v681, %v681
    %v714 = vpack.c.b16 %v682, %v682
    %v715 = vpack.c.b16 %v683, %v683
    %v716 = vpack.c.b16 %v684, %v684
    %v717 = vpack.c.b16 %v685, %v685
    %v718 = vpack.c.b16 %v686, %v686
    %v719 = vpack.c.b16 %v687, %v687
    %v720 = vpack.c.b16 %v688, %v688
    %v721 = vpack.c.b16 %v689, %v689
    %v722 = vpack.c.b16 %v690, %v690
    %v723 = vpack.c.b16 %v691, %v691
    %v724 = vpack.c.b16 %v692, %v692
    %v725 = vpack.c.b16 %v693, %v693
    %v726 = vpack.c.b16 %v694, %v694
    %759 = vst [vmem:[#allocation8] sm:$0xf] %v695
    %760 = vst [vmem:[#allocation8 + $0x4] sm:$0xf] %v696
    %761 = vst [vmem:[#allocation8 + $0x8] sm:$0xf] %v697
    %762 = vst [vmem:[#allocation8 + $0xc] sm:$0xf] %v698
    %763 = vst [vmem:[#allocation8 + $0x10] sm:$0xf] %v699
    %764 = vst [vmem:[#allocation8 + $0x14] sm:$0xf] %v700
    %765 = vst [vmem:[#allocation8 + $0x18] sm:$0xf] %v701
    %766 = vst [vmem:[#allocation8 + $0x1c] sm:$0xf] %v702
    %767 = vst [vmem:[#allocation8 + $0x20] sm:$0xf] %v703
    %768 = vst [vmem:[#allocation8 + $0x24] sm:$0xf] %v704
    %769 = vst [vmem:[#allocation8 + $0x28] sm:$0xf] %v705
    %770 = vst [vmem:[#allocation8 + $0x2c] sm:$0xf] %v706
    %771 = vst [vmem:[#allocation8 + $0x30] sm:$0xf] %v707
    %772 = vst [vmem:[#allocation8 + $0x34] sm:$0xf] %v708
    %773 = vst [vmem:[#allocation8 + $0x38] sm:$0xf] %v709
    %774 = vst [vmem:[#allocation8 + $0x3c] sm:$0xf] %v710
    %775 = vst [vmem:[#allocation8 + $0x40] sm:$0xf] %v711
    %776 = vst [vmem:[#allocation8 + $0x44] sm:$0xf] %v712
    %777 = vst [vmem:[#allocation8 + $0x48] sm:$0xf] %v713
    %778 = vst [vmem:[#allocation8 + $0x4c] sm:$0xf] %v714
    %779 = vst [vmem:[#allocation8 + $0x50] sm:$0xf] %v715
    %780 = vst [vmem:[#allocation8 + $0x54] sm:$0xf] %v716
    %781 = vst [vmem:[#allocation8 + $0x58] sm:$0xf] %v717
    %782 = vst [vmem:[#allocation8 + $0x5c] sm:$0xf] %v718
    %783 = vst [vmem:[#allocation8 + $0x60] sm:$0xf] %v719
    %784 = vst [vmem:[#allocation8 + $0x64] sm:$0xf] %v720
    %785 = vst [vmem:[#allocation8 + $0x68] sm:$0xf] %v721
    %786 = vst [vmem:[#allocation8 + $0x6c] sm:$0xf] %v722
    %787 = vst [vmem:[#allocation8 + $0x70] sm:$0xf] %v723
    %788 = vst [vmem:[#allocation8 + $0x74] sm:$0xf] %v724
    %789 = vst [vmem:[#allocation8 + $0x78] sm:$0xf] %v725
    %790 = vst [vmem:[#allocation8 + $0x7c] sm:$0xf] %v726
    %v791 = vpack.c.bf16 %v318, %v314
    %v792 = vpack.c.bf16 %v328, %v324
    %v793 = vpack.c.bf16 %v338, %v334
    %v794 = vpack.c.bf16 %v348, %v344
    %v795 = vpack.c.bf16 %v358, %v354
    %v796 = vpack.c.bf16 %v368, %v364
    %v797 = vpack.c.bf16 %v378, %v374
    %v798 = vpack.c.bf16 %v388, %v384
    %v799 = vpack.c.bf16 %v398, %v394
    %v800 = vpack.c.bf16 %v408, %v404
    %v801 = vpack.c.bf16 %v418, %v414
    %v802 = vpack.c.bf16 %v428, %v424
    %v803 = vpack.c.bf16 %v438, %v434
    %v804 = vpack.c.bf16 %v448, %v444
    %v805 = vpack.c.bf16 %v458, %v454
    %v806 = vpack.c.bf16 %v468, %v464
    %v823 = vunpack.c.l.b16 %v791
    %v824 = vunpack.c.h.b16 %v791
    %v825 = vunpack.c.l.b16 %v792
    %v826 = vunpack.c.h.b16 %v792
    %v827 = vunpack.c.l.b16 %v793
    %v828 = vunpack.c.h.b16 %v793
    %v829 = vunpack.c.l.b16 %v794
    %v830 = vunpack.c.h.b16 %v794
    %v831 = vunpack.c.l.b16 %v795
    %v832 = vunpack.c.h.b16 %v795
    %v833 = vunpack.c.l.b16 %v796
    %v834 = vunpack.c.h.b16 %v796
    %v835 = vunpack.c.l.b16 %v797
    %v836 = vunpack.c.h.b16 %v797
    %v837 = vunpack.c.l.b16 %v798
    %v838 = vunpack.c.h.b16 %v798
    %v839 = vunpack.c.l.b16 %v799
    %v840 = vunpack.c.h.b16 %v799
    %v841 = vunpack.c.l.b16 %v800
    %v842 = vunpack.c.h.b16 %v800
    %v843 = vunpack.c.l.b16 %v801
    %v844 = vunpack.c.h.b16 %v801
    %v845 = vunpack.c.l.b16 %v802
    %v846 = vunpack.c.h.b16 %v802
    %v847 = vunpack.c.l.b16 %v803
    %v848 = vunpack.c.h.b16 %v803
    %v849 = vunpack.c.l.b16 %v804
    %v850 = vunpack.c.h.b16 %v804
    %v851 = vunpack.c.l.b16 %v805
    %v852 = vunpack.c.h.b16 %v805
    %v853 = vunpack.c.l.b16 %v806
    %v854 = vunpack.c.h.b16 %v806
    %v855 = vpack.c.b16 %v823, %v823
    %v856 = vpack.c.b16 %v824, %v824
    %v857 = vpack.c.b16 %v825, %v825
    %v858 = vpack.c.b16 %v826, %v826
    %v859 = vpack.c.b16 %v827, %v827
    %v860 = vpack.c.b16 %v828, %v828
    %v861 = vpack.c.b16 %v829, %v829
    %v862 = vpack.c.b16 %v830, %v830
    %v863 = vpack.c.b16 %v831, %v831
    %v864 = vpack.c.b16 %v832, %v832
    %v865 = vpack.c.b16 %v833, %v833
    %v866 = vpack.c.b16 %v834, %v834
    %v867 = vpack.c.b16 %v835, %v835
    %v868 = vpack.c.b16 %v836, %v836
    %v869 = vpack.c.b16 %v837, %v837
    %v870 = vpack.c.b16 %v838, %v838
    %v871 = vpack.c.b16 %v839, %v839
    %v872 = vpack.c.b16 %v840, %v840
    %v873 = vpack.c.b16 %v841, %v841
    %v874 = vpack.c.b16 %v842, %v842
    %v875 = vpack.c.b16 %v843, %v843
    %v876 = vpack.c.b16 %v844, %v844
    %v877 = vpack.c.b16 %v845, %v845
    %v878 = vpack.c.b16 %v846, %v846
    %v879 = vpack.c.b16 %v847, %v847
    %v880 = vpack.c.b16 %v848, %v848
    %v881 = vpack.c.b16 %v849, %v849
    %v882 = vpack.c.b16 %v850, %v850
    %v883 = vpack.c.b16 %v851, %v851
    %v884 = vpack.c.b16 %v852, %v852
    %v885 = vpack.c.b16 %v853, %v853
    %v886 = vpack.c.b16 %v854, %v854
    %919 = vst [vmem:[#allocation9] sm:$0xf] %v855
    %920 = vst [vmem:[#allocation9 + $0x4] sm:$0xf] %v856
    %921 = vst [vmem:[#allocation9 + $0x8] sm:$0xf] %v857
    %922 = vst [vmem:[#allocation9 + $0xc] sm:$0xf] %v858
    %923 = vst [vmem:[#allocation9 + $0x10] sm:$0xf] %v859
    %924 = vst [vmem:[#allocation9 + $0x14] sm:$0xf] %v860
    %925 = vst [vmem:[#allocation9 + $0x18] sm:$0xf] %v861
    %926 = vst [vmem:[#allocation9 + $0x1c] sm:$0xf] %v862
    %927 = vst [vmem:[#allocation9 + $0x20] sm:$0xf] %v863
    %928 = vst [vmem:[#allocation9 + $0x24] sm:$0xf] %v864
    %929 = vst [vmem:[#allocation9 + $0x28] sm:$0xf] %v865
    %930 = vst [vmem:[#allocation9 + $0x2c] sm:$0xf] %v866
    %931 = vst [vmem:[#allocation9 + $0x30] sm:$0xf] %v867
    %932 = vst [vmem:[#allocation9 + $0x34] sm:$0xf] %v868
    %933 = vst [vmem:[#allocation9 + $0x38] sm:$0xf] %v869
    %934 = vst [vmem:[#allocation9 + $0x3c] sm:$0xf] %v870
    %935 = vst [vmem:[#allocation9 + $0x40] sm:$0xf] %v871
    %936 = vst [vmem:[#allocation9 + $0x44] sm:$0xf] %v872
    %937 = vst [vmem:[#allocation9 + $0x48] sm:$0xf] %v873
    %938 = vst [vmem:[#allocation9 + $0x4c] sm:$0xf] %v874
    %939 = vst [vmem:[#allocation9 + $0x50] sm:$0xf] %v875
    %940 = vst [vmem:[#allocation9 + $0x54] sm:$0xf] %v876
    %941 = vst [vmem:[#allocation9 + $0x58] sm:$0xf] %v877
    %942 = vst [vmem:[#allocation9 + $0x5c] sm:$0xf] %v878
    %943 = vst [vmem:[#allocation9 + $0x60] sm:$0xf] %v879
    %944 = vst [vmem:[#allocation9 + $0x64] sm:$0xf] %v880
    %945 = vst [vmem:[#allocation9 + $0x68] sm:$0xf] %v881
    %946 = vst [vmem:[#allocation9 + $0x6c] sm:$0xf] %v882
    %947 = vst [vmem:[#allocation9 + $0x70] sm:$0xf] %v883
    %948 = vst [vmem:[#allocation9 + $0x74] sm:$0xf] %v884
    %949 = vst [vmem:[#allocation9 + $0x78] sm:$0xf] %v885
    %950 = vst [vmem:[#allocation9 + $0x7c] sm:$0xf] %v886
    %v951 = vpack.c.bf16 %v508, %v505
    %v952 = vpack.c.bf16 %v516, %v513
    %v953 = vpack.c.bf16 %v524, %v521
    %v954 = vpack.c.bf16 %v532, %v529
    %v955 = vpack.c.bf16 %v540, %v537
    %v956 = vpack.c.bf16 %v548, %v545
    %v957 = vpack.c.bf16 %v556, %v553
    %v958 = vpack.c.bf16 %v564, %v561
    %v959 = vpack.c.bf16 %v572, %v569
    %v960 = vpack.c.bf16 %v580, %v577
    %v961 = vpack.c.bf16 %v588, %v585
    %v962 = vpack.c.bf16 %v596, %v593
    %v963 = vpack.c.bf16 %v604, %v601
    %v964 = vpack.c.bf16 %v612, %v609
    %v965 = vpack.c.bf16 %v620, %v617
    %v966 = vpack.c.bf16 %v628, %v625
    %v983 = vunpack.c.l.b16 %v951
    %v984 = vunpack.c.h.b16 %v951
    %v985 = vunpack.c.l.b16 %v952
    %v986 = vunpack.c.h.b16 %v952
    %v987 = vunpack.c.l.b16 %v953
    %v988 = vunpack.c.h.b16 %v953
    %v989 = vunpack.c.l.b16 %v954
    %v990 = vunpack.c.h.b16 %v954
    %v991 = vunpack.c.l.b16 %v955
    %v992 = vunpack.c.h.b16 %v955
    %v993 = vunpack.c.l.b16 %v956
    %v994 = vunpack.c.h.b16 %v956
    %v995 = vunpack.c.l.b16 %v957
    %v996 = vunpack.c.h.b16 %v957
    %v997 = vunpack.c.l.b16 %v958
    %v998 = vunpack.c.h.b16 %v958
    %v999 = vunpack.c.l.b16 %v959
    %v1000 = vunpack.c.h.b16 %v959
    %v1001 = vunpack.c.l.b16 %v960
    %v1002 = vunpack.c.h.b16 %v960
    %v1003 = vunpack.c.l.b16 %v961
    %v1004 = vunpack.c.h.b16 %v961
    %v1005 = vunpack.c.l.b16 %v962
    %v1006 = vunpack.c.h.b16 %v962
    %v1007 = vunpack.c.l.b16 %v963
    %v1008 = vunpack.c.h.b16 %v963
    %v1009 = vunpack.c.l.b16 %v964
    %v1010 = vunpack.c.h.b16 %v964
    %v1011 = vunpack.c.l.b16 %v965
    %v1012 = vunpack.c.h.b16 %v965
    %v1013 = vunpack.c.l.b16 %v966
    %v1014 = vunpack.c.h.b16 %v966
    %v1015 = vpack.c.b16 %v983, %v983
    %v1016 = vpack.c.b16 %v984, %v984
    %v1017 = vpack.c.b16 %v985, %v985
    %v1018 = vpack.c.b16 %v986, %v986
    %v1019 = vpack.c.b16 %v987, %v987
    %v1020 = vpack.c.b16 %v988, %v988
    %v1021 = vpack.c.b16 %v989, %v989
    %v1022 = vpack.c.b16 %v990, %v990
    %v1023 = vpack.c.b16 %v991, %v991
    %v1024 = vpack.c.b16 %v992, %v992
    %v1025 = vpack.c.b16 %v993, %v993
    %v1026 = vpack.c.b16 %v994, %v994
    %v1027 = vpack.c.b16 %v995, %v995
    %v1028 = vpack.c.b16 %v996, %v996
    %v1029 = vpack.c.b16 %v997, %v997
    %v1030 = vpack.c.b16 %v998, %v998
    %v1031 = vpack.c.b16 %v999, %v999
    %v1032 = vpack.c.b16 %v1000, %v1000
    %v1033 = vpack.c.b16 %v1001, %v1001
    %v1034 = vpack.c.b16 %v1002, %v1002
    %v1035 = vpack.c.b16 %v1003, %v1003
    %v1036 = vpack.c.b16 %v1004, %v1004
    %v1037 = vpack.c.b16 %v1005, %v1005
    %v1038 = vpack.c.b16 %v1006, %v1006
    %v1039 = vpack.c.b16 %v1007, %v1007
    %v1040 = vpack.c.b16 %v1008, %v1008
    %v1041 = vpack.c.b16 %v1009, %v1009
    %v1042 = vpack.c.b16 %v1010, %v1010
    %v1043 = vpack.c.b16 %v1011, %v1011
    %v1044 = vpack.c.b16 %v1012, %v1012
    %v1045 = vpack.c.b16 %v1013, %v1013
    %v1046 = vpack.c.b16 %v1014, %v1014
    %1079 = vst [vmem:[#allocation11] sm:$0xf] %v1015
    %1080 = vst [vmem:[#allocation11 + $0x4] sm:$0xf] %v1016
    %1081 = vst [vmem:[#allocation11 + $0x8] sm:$0xf] %v1017
    %1082 = vst [vmem:[#allocation11 + $0xc] sm:$0xf] %v1018
    %1083 = vst [vmem:[#allocation11 + $0x10] sm:$0xf] %v1019
    %1084 = vst [vmem:[#allocation11 + $0x14] sm:$0xf] %v1020
    %1085 = vst [vmem:[#allocation11 + $0x18] sm:$0xf] %v1021
    %1086 = vst [vmem:[#allocation11 + $0x1c] sm:$0xf] %v1022
    %1087 = vst [vmem:[#allocation11 + $0x20] sm:$0xf] %v1023
    %1088 = vst [vmem:[#allocation11 + $0x24] sm:$0xf] %v1024
    %1089 = vst [vmem:[#allocation11 + $0x28] sm:$0xf] %v1025
    %1090 = vst [vmem:[#allocation11 + $0x2c] sm:$0xf] %v1026
    %1091 = vst [vmem:[#allocation11 + $0x30] sm:$0xf] %v1027
    %1092 = vst [vmem:[#allocation11 + $0x34] sm:$0xf] %v1028
    %1093 = vst [vmem:[#allocation11 + $0x38] sm:$0xf] %v1029
    %1094 = vst [vmem:[#allocation11 + $0x3c] sm:$0xf] %v1030
    %1095 = vst [vmem:[#allocation11 + $0x40] sm:$0xf] %v1031
    %1096 = vst [vmem:[#allocation11 + $0x44] sm:$0xf] %v1032
    %1097 = vst [vmem:[#allocation11 + $0x48] sm:$0xf] %v1033
    %1098 = vst [vmem:[#allocation11 + $0x4c] sm:$0xf] %v1034
    %1099 = vst [vmem:[#allocation11 + $0x50] sm:$0xf] %v1035
    %1100 = vst [vmem:[#allocation11 + $0x54] sm:$0xf] %v1036
    %1101 = vst [vmem:[#allocation11 + $0x58] sm:$0xf] %v1037
    %1102 = vst [vmem:[#allocation11 + $0x5c] sm:$0xf] %v1038
    %1103 = vst [vmem:[#allocation11 + $0x60] sm:$0xf] %v1039
    %1104 = vst [vmem:[#allocation11 + $0x64] sm:$0xf] %v1040
    %1105 = vst [vmem:[#allocation11 + $0x68] sm:$0xf] %v1041
    %1106 = vst [vmem:[#allocation11 + $0x6c] sm:$0xf] %v1042
    %1107 = vst [vmem:[#allocation11 + $0x70] sm:$0xf] %v1043
    %1108 = vst [vmem:[#allocation11 + $0x74] sm:$0xf] %v1044
    %1109 = vst [vmem:[#allocation11 + $0x78] sm:$0xf] %v1045
    %1110 = vst [vmem:[#allocation11 + $0x7c] sm:$0xf] %v1046
    // Predicated region
    $region26: #{tpu_custom_call.1} parent=1 // pred_check
      _
    $region27: #{tpu_custom_call.1} parent=1 // pred_check_branch
      %1112 = sbr.rel (0) target = $region29
    $region28: #{tpu_custom_call.1} parent=1 // pred_region
      %s1114 = ssub.s32 2048, 2048
      %1115 = vsyncadd [#allocation4], %s1114
      %s1116 = sshll.u32 [#allocation8], 4
      %s1117 = int_to_ptr.vmem [resolvable:$true] %s1116
      %1122 = dma.vmem_to_hbm [thread:$0]  %s1117, 2048, %s3, [#allocation4], 64, 64, 4
    $region29: #{tpu_custom_call.1} parent=1 // pred_fallthru
      _
    // Predicated region
    $region30: #{tpu_custom_call.1} parent=1 // pred_check
      _
    $region31: #{tpu_custom_call.1} parent=1 // pred_check_branch
      %1124 = sbr.rel (0) target = $region33
    $region32: #{tpu_custom_call.1} parent=1 // pred_region
      %s1126 = ssub.s32 2048, 2048
      %1127 = vsyncadd [#allocation10], %s1126
      %s1128 = sshll.u32 [#allocation9], 4
      %s1129 = int_to_ptr.vmem [resolvable:$true] %s1128
      %1134 = dma.vmem_to_hbm [thread:$0]  %s1129, 2048, %s4, [#allocation10], 64, 64, 4
    $region33: #{tpu_custom_call.1} parent=1 // pred_fallthru
      _
    // Predicated region
    $region34: #{tpu_custom_call.1} parent=1 // pred_check
      _
    $region35: #{tpu_custom_call.1} parent=1 // pred_check_branch
      %1136 = sbr.rel (0) target = $region37
    $region36: #{tpu_custom_call.1} parent=1 // pred_region
      %s1138 = ssub.s32 2048, 2048
      %1139 = vsyncadd [#allocation10], %s1138
      %s1140 = sshll.u32 [#allocation11], 4
      %s1141 = int_to_ptr.vmem [resolvable:$true] %s1140
      %1146 = dma.vmem_to_hbm [thread:$0]  %s1141, 2048, %s5, [#allocation10], 64, 64, 4
    $region37: #{tpu_custom_call.1} parent=1 // pred_fallthru
      _
    // Predicated region
    $region38: #{tpu_custom_call.1} parent=1 // pred_check
      _
    $region39: #{tpu_custom_call.1} parent=1 // pred_check_branch
      %1148 = sbr.rel (0) target = $region41
    $region40: #{tpu_custom_call.1} parent=1 // pred_region
      %1149 = dma.done [#allocation4], 2048
    $region41: #{tpu_custom_call.1} parent=1 // pred_fallthru
      _
    // Predicated region
    $region42: #{tpu_custom_call.1} parent=1 // pred_check
      _
    $region43: #{tpu_custom_call.1} parent=1 // pred_check_branch
      %1151 = sbr.rel (0) target = $region45
    $region44: #{tpu_custom_call.1} parent=1 // pred_region
      %1152 = dma.done [#allocation10], 2048
    $region45: #{tpu_custom_call.1} parent=1 // pred_fallthru
      _
    // Predicated region
    $region46: #{tpu_custom_call.1} parent=1 // pred_check
      _
    $region47: #{tpu_custom_call.1} parent=1 // pred_check_branch
      %1154 = sbr.rel (0) target = $region49
    $region48: #{tpu_custom_call.1} parent=1 // pred_region
      %1155 = dma.done [#allocation10], 2048
    $region49: #{tpu_custom_call.1} parent=1 // pred_fallthru
      _
    %1156 = vsyncpa [#allocation3], 1
    %1157 = vsyncpa [#allocation6], 1
    %1158 = vsyncpa [#allocation4], 1
    %1159 = vsyncpa [#allocation10], 1

</llo_original>
